<compile_context>
chip_gen: v5e
topology: v5e:2x2
jax: 0.10.0
libtpu: 0.0.40
codegen_flags: <defaults>
</compile_context>

<pallas_src>
import functools
import math

import jax
import jax.numpy as jnp
from jax.experimental import pallas as pl
from jax.experimental.pallas import tpu as pltpu


def _round_up(x, m):
    return (x + m - 1) // m * m


def attention_kernel(emb_u_ref, emb_h_ref, w1_ref, b1_ref, w2_ref, b2_ref,
                     out_ref, h1_ref, *, emb_dim):
    """Grid axis 0 sweeps W2 column tiles of width TN."""

    # --- hoisted attention + L1: run once, keep h1 in VMEM scratch ---------
    @pl.when(pl.program_id(0) == 0)
    def _():
        eu = emb_u_ref[...].astype(jnp.float32)              # (N, D)
        eh = emb_h_ref[...].astype(jnp.float32)              # (N, D)
        # a = softmax( sum(emb_u * emb_h, 1) / sqrt(D) )  over the N rows.
        scores = jnp.sum(eu * eh, axis=1, keepdims=True)     # (N, 1)
        scores = scores * (1.0 / math.sqrt(emb_dim))
        m = jnp.max(scores)                                  # max trick
        p = jnp.exp(scores - m)
        a = p / jnp.sum(p)                                   # (N, 1)
        # pooled = a^T @ emb_h -> (1, D)
        pooled = jnp.sum(a * eh, axis=0, keepdims=True)
        # L1: (1, D) @ (D, HID_pad) + b1   (bf16 weights, f32 accumulate)
        h1_ref[...] = (jnp.dot(pooled, w1_ref[...].astype(jnp.float32),
                               preferred_element_type=jnp.float32)
                       + b1_ref[...])

    # --- per-tile L2: (1, HID_pad) @ (HID_pad, TN) + b2, sigmoid ------------
    h2 = (jnp.dot(h1_ref[...], w2_ref[...].astype(jnp.float32),
                  preferred_element_type=jnp.float32)
          + b2_ref[...])
    out_ref[...] = jax.nn.sigmoid(h2)                        # (1, TN)


def pad_params(params, tn=2048):
    """One-time re-layout of the module weights for the TPU kernel.

    HID (1000) is padded to 1024 and P to a multiple of `tn` (tn % 128 == 0)
    so every tile is lane-dense.  W1/W2 are stored in bfloat16 (the kernel is
    bound on the weight stream); biases / embeddings stay f32.  Zero padding
    keeps the math exact; the wrapper slices the output back to poi_count.
    """
    assert tn % 128 == 0
    w1, b1, w2, b2 = params["w1"], params["b1"], params["w2"], params["b2"]
    D, HID = w1.shape
    P = w2.shape[1]
    hid_pad = _round_up(HID, 128)
    p_pad = _round_up(P, tn)
    return dict(
        user_emb=params["user_emb"],
        poi_emb=params["poi_emb"],
        w1=jnp.pad(w1, ((0, 0), (0, hid_pad - HID))).astype(jnp.bfloat16),
        b1=jnp.pad(b1, ((0, 0), (0, hid_pad - HID))),
        w2=jnp.pad(w2, ((0, hid_pad - HID), (0, p_pad - P))).astype(jnp.bfloat16),
        b2=jnp.pad(b2, ((0, 0), (0, p_pad - P))),
        poi_count=P,
        tn=tn,
    )


def attention_forward(userid, H, padded):
    # Embedding gathers (plain-JAX glue, not the hot path).
    # TODO(synk): fold the gathers into the kernel via
    # pltpu.PrefetchScalarGridSpec(num_scalar_prefetch=2) + pl.Element
    # row-gather BlockSpecs if the history length N ever gets large.
    emb_u = padded["user_emb"][userid]                       # (N, D) f32
    emb_h = padded["poi_emb"][H]                             # (N, D) f32
    w1, b1 = padded["w1"], padded["b1"]                      # (D,HIDp) bf16 / (1,HIDp) f32
    w2, b2 = padded["w2"], padded["b2"]                      # (HIDp,Pp) bf16 / (1,Pp) f32

    N, D = emb_u.shape
    hid_pad = w1.shape[1]
    p_pad = w2.shape[1]
    tn = padded["tn"]
    grid = (p_pad // tn,)

    cost = pl.CostEstimate(
        flops=2 * hid_pad * p_pad + 2 * D * hid_pad + 4 * N * D,
        transcendentals=p_pad + N,
        bytes_accessed=(w2.size * 2 + w1.size * 2
                        + (emb_u.size + emb_h.size + b1.size + b2.size) * 4
                        + p_pad * 4),
    )

    out = pl.pallas_call(
        functools.partial(attention_kernel, emb_dim=D),
        out_shape=jax.ShapeDtypeStruct((1, p_pad), jnp.float32),
        grid=grid,
        in_specs=[
            pl.BlockSpec((N, D), lambda j: (0, 0)),          # emb_u (resident)
            pl.BlockSpec((N, D), lambda j: (0, 0)),          # emb_h (resident)
            pl.BlockSpec((D, hid_pad), lambda j: (0, 0)),    # W1    (resident)
            pl.BlockSpec((1, hid_pad), lambda j: (0, 0)),    # b1    (resident)
            pl.BlockSpec((hid_pad, tn), lambda j: (0, j)),   # W2 tile (pipelined)
            pl.BlockSpec((1, tn), lambda j: (0, j)),         # b2 tile
        ],
        out_specs=pl.BlockSpec((1, tn), lambda j: (0, j)),   # lane-dense out
        scratch_shapes=[pltpu.VMEM((1, hid_pad), jnp.float32)],
        compiler_params=pltpu.CompilerParams(
            dimension_semantics=("arbitrary",)),
        cost_estimate=cost,
    )(emb_u, emb_h, w1, b1, w2, b2)
    return out[0, :padded["poi_count"]]                      # (poi_count,)


def init_params(key, user_count, poi_count, emb_dimension, hidden=1000):
    k1, k2, k3, k4, k5, k6 = jax.random.split(key, 6)
    # xavier_normal for the embedding tables (as in init_emb)
    std_u = math.sqrt(2.0 / (user_count + emb_dimension))
    std_p = math.sqrt(2.0 / (poi_count + emb_dimension))
    user_emb = std_u * jax.random.normal(k1, (user_count, emb_dimension),
                                         jnp.float32)
    poi_emb = std_p * jax.random.normal(k2, (poi_count, emb_dimension),
                                        jnp.float32)
    # Linear layers (PyTorch stores (out, in); we store transposed (in, out))
    lim1 = 1.0 / math.sqrt(emb_dimension)
    w1 = jax.random.uniform(k3, (emb_dimension, hidden), jnp.float32,
                            -lim1, lim1)
    b1 = jax.random.uniform(k4, (1, hidden), jnp.float32, -lim1, lim1)
    lim2 = 1.0 / math.sqrt(hidden)
    w2 = jax.random.uniform(k5, (hidden, poi_count), jnp.float32, -lim2, lim2)
    b2 = jax.random.uniform(k6, (1, poi_count), jnp.float32, -lim2, lim2)
    return dict(user_emb=user_emb, poi_emb=poi_emb, w1=w1, b1=b1, w2=w2, b2=b2)


def reference_forward(userid, H, padded):
    """Plain-JAX reference using the exact (bf16-stored, zero-padded) weights
    the kernel sees, computed in f32 at highest matmul precision."""
    hi = jax.lax.Precision.HIGHEST
    emb_u = padded["user_emb"][userid].astype(jnp.float32)
    emb_h = padded["poi_emb"][H].astype(jnp.float32)
    w1 = padded["w1"].astype(jnp.float32)
    b1 = padded["b1"].astype(jnp.float32)
    w2 = padded["w2"].astype(jnp.float32)
    b2 = padded["b2"].astype(jnp.float32)
    a = jnp.sum(emb_u * emb_h, axis=1) / math.sqrt(emb_u.shape[1])
    a = jax.nn.softmax(a)
    pooled = jnp.dot(a[None, :], emb_h, precision=hi)
    h1 = jnp.dot(pooled, w1, precision=hi) + b1
    h2 = jnp.dot(h1, w2, precision=hi) + b2
    return jax.nn.sigmoid(h2).reshape(-1)[:padded["poi_count"]]


if __name__ == "__main__":
    user_count = 10
    poi_count = 300        # POI_count of the module (padded to a tile multiple)
    emb_dimension = 32
    hidden = 1000          # fixed by the module definition (L1: D -> 1000)
    N = 8                  # length of the POI history H

    key = jax.random.PRNGKey(0)
    pk, ik = jax.random.split(key)
    params = init_params(pk, user_count, poi_count, emb_dimension, hidden)

    # tn=128 keeps the toy demo multi-tile (grid of 3 over P_pad=384);
    # production: tn=1024-2048 on v7x, 4096-8192 on v5e/v6e.
    padded = pad_params(params, tn=128)

    # userid: the same user repeated for each history entry; H: POI indices.
    userid = jnp.full((N,), 3, dtype=jnp.int32)
    H = jax.random.randint(ik, (N,), 0, poi_count, dtype=jnp.int32)

    out = attention_forward(userid, H, padded)
    out = jax.block_until_ready(out)

    ref = reference_forward(userid, H, padded)
    assert out.shape == (poi_count,)
    assert jnp.allclose(out, ref, atol=1e-4, rtol=1e-4), \
        float(jnp.max(jnp.abs(out - ref)))

    print("KERNEL_OK")
</pallas_src>

<mosaic_0001>
module attributes {stable_mosaic.version = 11 : i64} {
  func.func @attention_kernel(%arg0: i32, %arg1: memref<8x32xf32, #tpu.memory_space<vmem>>, %arg2: memref<8x32xf32, #tpu.memory_space<vmem>>, %arg3: memref<32x1024xbf16, #tpu.memory_space<vmem>>, %arg4: memref<1x1024xf32, #tpu.memory_space<vmem>>, %arg5: memref<1024x128xbf16, #tpu.memory_space<vmem>>, %arg6: memref<1x128xf32, #tpu.memory_space<vmem>>, %arg7: memref<1x128xf32, #tpu.memory_space<vmem>>, %arg8: memref<1x1024xf32, #tpu.memory_space<vmem>>) attributes {dimension_semantics = [#tpu.dimension_semantics<arbitrary>], iteration_bounds = array<i64: 3>, scalar_prefetch = 0 : i64, scratch_operands = 1 : i64, tpu.core_type = #tpu.core_type<tc>, window_params = [{pipeline_mode = #tpu.pipeline_mode<synchronous>, transform_indices = @transform_0, window_bounds = array<i64: 8, 32>}, {pipeline_mode = #tpu.pipeline_mode<synchronous>, transform_indices = @transform_1, window_bounds = array<i64: 8, 32>}, {pipeline_mode = #tpu.pipeline_mode<synchronous>, transform_indices = @transform_2, window_bounds = array<i64: 32, 1024>}, {pipeline_mode = #tpu.pipeline_mode<synchronous>, transform_indices = @transform_3, window_bounds = array<i64: 1, 1024>}, {transform_indices = @transform_4, window_bounds = array<i64: 1024, 128>}, {transform_indices = @transform_5, window_bounds = array<i64: 1, 128>}, {transform_indices = @transform_6, window_bounds = array<i64: 1, 128>}]} {
    %c0_i32 = arith.constant 0 : i32
    %0 = arith.cmpi eq, %arg0, %c0_i32 : i32
    %1 = arith.extui %0 : i1 to i32
    %c0_i32_0 = arith.constant 0 : i32
    %2 = arith.cmpi ne, %1, %c0_i32_0 : i32
    scf.if %2 {
      %c0_9 = arith.constant 0 : index
      %c0_10 = arith.constant 0 : index
      %15 = vector.load %arg1[%c0_9, %c0_10] : memref<8x32xf32, #tpu.memory_space<vmem>>, vector<8x32xf32>
      %c0_11 = arith.constant 0 : index
      %c0_12 = arith.constant 0 : index
      %16 = vector.load %arg2[%c0_11, %c0_12] : memref<8x32xf32, #tpu.memory_space<vmem>>, vector<8x32xf32>
      %17 = arith.mulf %15, %16 : vector<8x32xf32>
      %cst_13 = arith.constant dense<0.000000e+00> : vector<8xf32>
      %18 = vector.multi_reduction <add>, %17, %cst_13 [1] : vector<8x32xf32> to vector<8xf32>
      %19 = vector.shape_cast %18 : vector<8xf32> to vector<8x1xf32>
      %cst_14 = arith.constant 0.176776692 : f32
      %20 = vector.broadcast %cst_14 : f32 to vector<8x1xf32>
      %21 = arith.mulf %19, %20 : vector<8x1xf32>
      %22 = vector.shape_cast %21 : vector<8x1xf32> to vector<1x8x1xf32>
      %cst_15 = arith.constant dense<0xFF800000> : vector<1xf32>
      %23 = vector.multi_reduction <maximumf>, %22, %cst_15 [1, 2] : vector<1x8x1xf32> to vector<1xf32>
      %24 = vector.shape_cast %23 : vector<1xf32> to vector<1x1x1xf32>
      %25 = vector.extract %24[0, 0, 0] : f32 from vector<1x1x1xf32>
      %26 = vector.broadcast %25 : f32 to vector<8x1xf32>
      %27 = arith.subf %21, %26 : vector<8x1xf32>
      %28 = math.exp %27 : vector<8x1xf32>
      %29 = vector.shape_cast %28 : vector<8x1xf32> to vector<1x8x1xf32>
      %cst_16 = arith.constant dense<0.000000e+00> : vector<1xf32>
      %30 = vector.multi_reduction <add>, %29, %cst_16 [1, 2] : vector<1x8x1xf32> to vector<1xf32>
      %31 = vector.shape_cast %30 : vector<1xf32> to vector<1x1x1xf32>
      %32 = vector.extract %31[0, 0, 0] : f32 from vector<1x1x1xf32>
      %33 = vector.broadcast %32 : f32 to vector<8x1xf32>
      %34 = arith.divf %28, %33 : vector<8x1xf32>
      %35 = vector.broadcast %34 : vector<8x1xf32> to vector<8x32xf32>
      %36 = arith.mulf %35, %16 : vector<8x32xf32>
      %cst_17 = arith.constant dense<0.000000e+00> : vector<32xf32>
      %37 = vector.multi_reduction <add>, %36, %cst_17 [0] : vector<8x32xf32> to vector<32xf32>
      %38 = vector.shape_cast %37 : vector<32xf32> to vector<1x32xf32>
      %c0_18 = arith.constant 0 : index
      %c0_19 = arith.constant 0 : index
      %39 = vector.load %arg3[%c0_18, %c0_19] : memref<32x1024xbf16, #tpu.memory_space<vmem>>, vector<32x1024xbf16>
      %40 = arith.extf %39 : vector<32x1024xbf16> to vector<32x1024xf32>
      %cst_20 = arith.constant dense<0.000000e+00> : vector<1x1024xf32>
      %41 = tpu.matmul %38, %40, %cst_20 {dimension_numbers = #tpu.dot_dimension_numbers<[1], [0], [0], [1], [0, 0, 1, 1], [], []>} : vector<1x32xf32>, vector<32x1024xf32>, vector<1x1024xf32> -> vector<1x1024xf32>
      %c0_21 = arith.constant 0 : index
      %c0_22 = arith.constant 0 : index
      %42 = vector.load %arg4[%c0_21, %c0_22] : memref<1x1024xf32, #tpu.memory_space<vmem>>, vector<1x1024xf32>
      %43 = arith.addf %41, %42 : vector<1x1024xf32>
      %c0_23 = arith.constant 0 : index
      %c0_24 = arith.constant 0 : index
      %44 = vector.load %arg8[%c0_23, %c0_24] : memref<1x1024xf32, #tpu.memory_space<vmem>>, vector<1x1024xf32>
      tpu.vector_store %arg8[%c0_23, %c0_24], %43 {strides = array<i32>} : memref<1x1024xf32, #tpu.memory_space<vmem>>, vector<1x1024xf32>,
    } else {
    }
    %c0 = arith.constant 0 : index
    %c0_1 = arith.constant 0 : index
    %3 = vector.load %arg8[%c0, %c0_1] : memref<1x1024xf32, #tpu.memory_space<vmem>>, vector<1x1024xf32>
    %c0_2 = arith.constant 0 : index
    %c0_3 = arith.constant 0 : index
    %4 = vector.load %arg5[%c0_2, %c0_3] : memref<1024x128xbf16, #tpu.memory_space<vmem>>, vector<1024x128xbf16>
    %5 = arith.extf %4 : vector<1024x128xbf16> to vector<1024x128xf32>
    %cst = arith.constant dense<0.000000e+00> : vector<1x128xf32>
    %6 = tpu.matmul %3, %5, %cst {dimension_numbers = #tpu.dot_dimension_numbers<[1], [0], [0], [1], [0, 0, 1, 1], [], []>} : vector<1x1024xf32>, vector<1024x128xf32>, vector<1x128xf32> -> vector<1x128xf32>
    %c0_4 = arith.constant 0 : index
    %c0_5 = arith.constant 0 : index
    %7 = vector.load %arg6[%c0_4, %c0_5] : memref<1x128xf32, #tpu.memory_space<vmem>>, vector<1x128xf32>
    %8 = arith.addf %6, %7 : vector<1x128xf32>
    %9 = arith.negf %8 : vector<1x128xf32>
    %10 = math.exp %9 : vector<1x128xf32>
    %cst_6 = arith.constant 1.000000e+00 : f32
    %11 = vector.broadcast %cst_6 : f32 to vector<1x128xf32>
    %12 = arith.addf %11, %10 : vector<1x128xf32>
    %13 = arith.divf %11, %12 : vector<1x128xf32>
    %c0_7 = arith.constant 0 : index
    %c0_8 = arith.constant 0 : index
    %14 = vector.load %arg7[%c0_7, %c0_8] : memref<1x128xf32, #tpu.memory_space<vmem>>, vector<1x128xf32>
    tpu.vector_store %arg7[%c0_7, %c0_8], %13 {strides = array<i32>} : memref<1x128xf32, #tpu.memory_space<vmem>>, vector<1x128xf32>,
    return
  }
  func.func @transform_0(%arg0: i32) -> (i32, i32) {
    %c0_i32 = arith.constant 0 : i32
    %c0_i32_0 = arith.constant 0 : i32
    %c0_i32_1 = arith.constant 0 : i32
    return %c0_i32, %c0_i32_0 : i32, i32
  }
  func.func @transform_1(%arg0: i32) -> (i32, i32) {
    %c0_i32 = arith.constant 0 : i32
    %c0_i32_0 = arith.constant 0 : i32
    %c0_i32_1 = arith.constant 0 : i32
    return %c0_i32, %c0_i32_0 : i32, i32
  }
  func.func @transform_2(%arg0: i32) -> (i32, i32) {
    %c0_i32 = arith.constant 0 : i32
    %c0_i32_0 = arith.constant 0 : i32
    %c0_i32_1 = arith.constant 0 : i32
    return %c0_i32, %c0_i32_0 : i32, i32
  }
  func.func @transform_3(%arg0: i32) -> (i32, i32) {
    %c0_i32 = arith.constant 0 : i32
    %c0_i32_0 = arith.constant 0 : i32
    %c0_i32_1 = arith.constant 0 : i32
    return %c0_i32, %c0_i32_0 : i32, i32
  }
  func.func @transform_4(%arg0: i32) -> (i32, i32) {
    %c0_i32 = arith.constant 0 : i32
    %c0_i32_0 = arith.constant 0 : i32
    return %c0_i32, %arg0 : i32, i32
  }
  func.func @transform_5(%arg0: i32) -> (i32, i32) {
    %c0_i32 = arith.constant 0 : i32
    %c0_i32_0 = arith.constant 0 : i32
    return %c0_i32, %arg0 : i32, i32
  }
  func.func @transform_6(%arg0: i32) -> (i32, i32) {
    %c0_i32 = arith.constant 0 : i32
    %c0_i32_0 = arith.constant 0 : i32
    return %c0_i32, %arg0 : i32, i32
  }
}

</mosaic_0001>

<llo_original>
// kernel: tpu_custom_call.1
$region0: #{tpu_custom_call.1}
  #allocation0 [shape = 'u32[]', space=smem, size = 0x4, offset = 0x4, fixed_abs, tag = 'smem constant byte address 0x4 - core index']
  #allocation1 [shape = 'u32[72,128]{1,0:T(1,128)}', space=vmem, size = 0x9000, scoped, tag = 'internal scratch']
  #allocation2 [shape = 'f32[1,1024]{1,0:T(1,128)}', space=vmem, size = 0x1000, scoped, tag = 'scratch operand']
  %s0 = inlined_call_operand.hbm [shape: f32[8,32], index: 0, kind: input, shape index: {}]
  %s1 = inlined_call_operand.hbm [shape: f32[8,32], index: 1, kind: input, shape index: {}]
  %s2 = inlined_call_operand.hbm [shape: bf16[32,1024], index: 2, kind: input, shape index: {}]
  %s3 = inlined_call_operand.hbm [shape: f32[1,1024], index: 3, kind: input, shape index: {}]
  %s4 = inlined_call_operand.hbm [shape: bf16[1024,384], index: 4, kind: input, shape index: {}]
  %s5 = inlined_call_operand.vmem [shape: f32[1,384], index: 5, kind: input, shape index: {}]
  %s6 = inlined_call_operand.hbm [shape: f32[1,384], index: 6, kind: output, shape index: {}]
  %s7 = sld [smem:[#allocation0]]
  $region81: #{tpu_custom_call.1} parent=0
    _
  %s9 = ssub.s32 1, %s7
  %s10 = scalar_select 0, %s9, %s7
  $region1: #{tpu_custom_call.1} parent=0
    #allocation3 [shape = 'u8[4096]{0}', space=vmem, size = 0x1000, scoped, tag = 'input window, operand 0, single buffered']
    #allocation4 [shape = 's32[2]{0}', space=sflag, size = 0x8, scoped, tag = 'scoped memory for tpu_custom_call.1']
    #allocation5 [shape = 's32[2]{0}', space=sflag, size = 0x8, scoped, tag = 'scoped memory for tpu_custom_call.1']
    #allocation6 [shape = 'u8[4096]{0}', space=vmem, size = 0x1000, scoped, tag = 'input window, operand 1, single buffered']
    #allocation7 [shape = 's32[1]{0}', space=sflag, size = 0x4, scoped, tag = 'scoped memory for tpu_custom_call.1']
    #allocation8 [shape = 'u8[65536]{0}', space=vmem, size = 0x10000, scoped, tag = 'input window, operand 2, single buffered']
    #allocation9 [shape = 'u8[4096]{0}', space=vmem, size = 0x1000, scoped, tag = 'input window, operand 3, single buffered']
    #allocation10 [shape = 's32[1]{0}', space=sflag, size = 0x4, scoped, tag = 'scoped memory for tpu_custom_call.1']
    #allocation11 [shape = 'u8[524288]{0}', space=vmem, size = 0x80000, scoped, tag = 'input window, operand 4']
    #allocation12 [shape = 'u8[1024]{0}', space=vmem, size = 0x400, scoped, tag = 'output window, operand 0']
    %11 = vsyncpa [#allocation4], 0
    %12 = vsyncpa [#allocation7], 0
    %13 = vsyncpa [#allocation10], 0
    %14 = vsyncpa [#allocation5], 0
    %s15 = scalar_lea.sflag [#allocation5], 1
    %16 = vsyncpa %s15, 0
    loop: start=0, step=1, limit=5
    $region2: #{tpu_custom_call.1} parent=1 // loop_pre_header
      _
    $region3: #{tpu_custom_call.1} parent=1 // loop_header
      %s18 = sphi 0, %s22
      %p19 = scmp.ge.s32.totalorder %s18, 5
      %s26 = sphi 0, %s26
      %s28 = sphi 0, %s26
      %s29 = sphi 0, %s28
      %s43 = sphi 0, %s29
      %s47 = sphi 0, %s47
      %s49 = sphi 0, %s47
      %s50 = sphi 0, %s49
      %s64 = sphi 0, %s50
      %s68 = sphi 0, %s68
      %s70 = sphi 0, %s68
      %s71 = sphi 0, %s70
      %s85 = sphi 0, %s71
      %s89 = sphi 0, %s89
      %s91 = sphi 0, %s89
      %s92 = sphi 0, %s91
      %s106 = sphi 0, %s92
      %s112 = sphi 0, %s114
      %s115 = sphi 0, %s112
      %s116 = sphi 0, %s115
      %s132 = sphi 0, %s116
      %s138 = sphi 0, %s140
      %s141 = sphi 0, %s138
      %s142 = sphi 0, %s141
      %s158 = sphi 0, %s142
      %s164 = sphi 0, %s166
      %s167 = sphi 0, %s164
      %s168 = sphi 0, %s167
      %s184 = sphi 0, %s168
    $region4: #{tpu_custom_call.1} parent=1 // loop_header_branch
      %21 = sbr.rel (%p19) target = $region8
    $region5: #{tpu_custom_call.1} parent=1 // loop_body
      %s23 = ssub.s32 %s18, 1
      %s24 = ssub.s32 %s18, 2
      %s25 = sadd.s32 %s18, 1
      %s27 = sadd.s32 %s26, 1
      %p30 = scmp.eq.s32.totalorder %s18, 2
      %p31 = scmp.ne.s32.totalorder %s26, %s28
      %p32 = scmp.eq.s32.totalorder %s18, 0
      %p33 = por %p31, %p32
      %p34 = scmp.ne.s32.totalorder %s26, %s28
      %p35 = scmp.eq.s32.totalorder %s23, 2
      %p36 = por %p34, %p35
      %p37 = scmp.ne.s32.totalorder %s28, %s29
      %p38 = scmp.eq.s32.totalorder %s23, 0
      %p39 = por %p37, %p38
      %p40 = scmp.ne.s32.totalorder %s28, %s29
      %p41 = scmp.eq.s32.totalorder %s24, 2
      %p42 = por %p40, %p41
      %p44 = scmp.ne.s32.totalorder %s29, %s43
      %p45 = scmp.eq.s32.totalorder %s24, 0
      %p46 = por %p44, %p45
      %s48 = sadd.s32 %s47, 1
      %p51 = scmp.eq.s32.totalorder %s18, 2
      %p52 = scmp.ne.s32.totalorder %s47, %s49
      %p53 = scmp.eq.s32.totalorder %s18, 0
      %p54 = por %p52, %p53
      %p55 = scmp.ne.s32.totalorder %s47, %s49
      %p56 = scmp.eq.s32.totalorder %s23, 2
      %p57 = por %p55, %p56
      %p58 = scmp.ne.s32.totalorder %s49, %s50
      %p59 = scmp.eq.s32.totalorder %s23, 0
      %p60 = por %p58, %p59
      %p61 = scmp.ne.s32.totalorder %s49, %s50
      %p62 = scmp.eq.s32.totalorder %s24, 2
      %p63 = por %p61, %p62
      %p65 = scmp.ne.s32.totalorder %s50, %s64
      %p66 = scmp.eq.s32.totalorder %s24, 0
      %p67 = por %p65, %p66
      %s69 = sadd.s32 %s68, 1
      %p72 = scmp.eq.s32.totalorder %s18, 2
      %p73 = scmp.ne.s32.totalorder %s68, %s70
      %p74 = scmp.eq.s32.totalorder %s18, 0
      %p75 = por %p73, %p74
      %p76 = scmp.ne.s32.totalorder %s68, %s70
      %p77 = scmp.eq.s32.totalorder %s23, 2
      %p78 = por %p76, %p77
      %p79 = scmp.ne.s32.totalorder %s70, %s71
      %p80 = scmp.eq.s32.totalorder %s23, 0
      %p81 = por %p79, %p80
      %p82 = scmp.ne.s32.totalorder %s70, %s71
      %p83 = scmp.eq.s32.totalorder %s24, 2
      %p84 = por %p82, %p83
      %p86 = scmp.ne.s32.totalorder %s71, %s85
      %p87 = scmp.eq.s32.totalorder %s24, 0
      %p88 = por %p86, %p87
      %s90 = sadd.s32 %s89, 1
      %p93 = scmp.eq.s32.totalorder %s18, 2
      %p94 = scmp.ne.s32.totalorder %s89, %s91
      %p95 = scmp.eq.s32.totalorder %s18, 0
      %p96 = por %p94, %p95
      %p97 = scmp.ne.s32.totalorder %s89, %s91
      %p98 = scmp.eq.s32.totalorder %s23, 2
      %p99 = por %p97, %p98
      %p100 = scmp.ne.s32.totalorder %s91, %s92
      %p101 = scmp.eq.s32.totalorder %s23, 0
      %p102 = por %p100, %p101
      %p103 = scmp.ne.s32.totalorder %s91, %s92
      %p104 = scmp.eq.s32.totalorder %s24, 2
      %p105 = por %p103, %p104
      %p107 = scmp.ne.s32.totalorder %s92, %s106
      %p108 = scmp.eq.s32.totalorder %s24, 0
      %p109 = por %p107, %p108
      %s110 = ssub.s32 %s18, %s25
      %p111 = scmp.eq.s32.totalorder %s110, 0
      %s113 = sadd.s32 %s112, 1
      %s114 = scalar_select %p111, %s112, %s113
      %p117 = pneg %p111
      %p118 = scmp.eq.s32.totalorder %s18, 2
      %p119 = por %p117, %p118
      %p120 = scmp.ne.s32.totalorder %s112, %s115
      %p121 = scmp.eq.s32.totalorder %s18, 0
      %p122 = por %p120, %p121
      %p123 = scmp.ne.s32.totalorder %s112, %s115
      %p124 = scmp.eq.s32.totalorder %s23, 2
      %p125 = por %p123, %p124
      %p126 = scmp.ne.s32.totalorder %s115, %s116
      %p127 = scmp.eq.s32.totalorder %s23, 0
      %p128 = por %p126, %p127
      %p129 = scmp.ne.s32.totalorder %s115, %s116
      %p130 = scmp.eq.s32.totalorder %s24, 2
      %p131 = por %p129, %p130
      %p133 = scmp.ne.s32.totalorder %s116, %s132
      %p134 = scmp.eq.s32.totalorder %s24, 0
      %p135 = por %p133, %p134
      %s136 = ssub.s32 %s18, %s25
      %p137 = scmp.eq.s32.totalorder %s136, 0
      %s139 = sadd.s32 %s138, 1
      %s140 = scalar_select %p137, %s138, %s139
      %p143 = pneg %p137
      %p144 = scmp.eq.s32.totalorder %s18, 2
      %p145 = por %p143, %p144
      %p146 = scmp.ne.s32.totalorder %s138, %s141
      %p147 = scmp.eq.s32.totalorder %s18, 0
      %p148 = por %p146, %p147
      %p149 = scmp.ne.s32.totalorder %s138, %s141
      %p150 = scmp.eq.s32.totalorder %s23, 2
      %p151 = por %p149, %p150
      %p152 = scmp.ne.s32.totalorder %s141, %s142
      %p153 = scmp.eq.s32.totalorder %s23, 0
      %p154 = por %p152, %p153
      %p155 = scmp.ne.s32.totalorder %s141, %s142
      %p156 = scmp.eq.s32.totalorder %s24, 2
      %p157 = por %p155, %p156
      %p159 = scmp.ne.s32.totalorder %s142, %s158
      %p160 = scmp.eq.s32.totalorder %s24, 0
      %p161 = por %p159, %p160
      %s162 = ssub.s32 %s18, %s25
      %p163 = scmp.eq.s32.totalorder %s162, 0
      %s165 = sadd.s32 %s164, 1
      %s166 = scalar_select %p163, %s164, %s165
      %p169 = pneg %p163
      %p170 = scmp.eq.s32.totalorder %s18, 2
      %p171 = por %p169, %p170
      %p172 = scmp.ne.s32.totalorder %s164, %s167
      %p173 = scmp.eq.s32.totalorder %s18, 0
      %p174 = por %p172, %p173
      %p175 = scmp.ne.s32.totalorder %s164, %s167
      %p176 = scmp.eq.s32.totalorder %s23, 2
      %p177 = por %p175, %p176
      %p178 = scmp.ne.s32.totalorder %s167, %s168
      %p179 = scmp.eq.s32.totalorder %s23, 0
      %p180 = por %p178, %p179
      %p181 = scmp.ne.s32.totalorder %s167, %s168
      %p182 = scmp.eq.s32.totalorder %s24, 2
      %p183 = por %p181, %p182
      %p185 = scmp.ne.s32.totalorder %s168, %s184
      %p186 = scmp.eq.s32.totalorder %s24, 0
      %p187 = por %p185, %p186
      %p188 = scmp.le.s32.totalorder 1, %s18
      %p189 = scmp.lt.s32.totalorder %s18, 4
      %p190 = pnand %p188, %p189
      %p191 = pneg %p190
      // Predicated region
      $region9: #{tpu_custom_call.1} parent=5 // pred_check
        _
      $region10: #{tpu_custom_call.1} parent=5 // pred_check_branch
        %193 = sbr.rel (%p190) target = $region12
      $region11: #{tpu_custom_call.1} parent=5 // pred_region
        %s194 = ssub.s32 %s18, 1
        // Predicated region
        $region13: #{tpu_custom_call.1} parent=11 // pred_check
          %p195 = pneg %p39
        $region14: #{tpu_custom_call.1} parent=11 // pred_check_branch
          %197 = sbr.rel (%p195) target = $region16
        $region15: #{tpu_custom_call.1} parent=11 // pred_region
          %199 = vsyncadd [#allocation4], 0
          %s201 = sshll.u32 %s0, 4
          %s202 = int_to_ptr.hbm [resolvable:$true] %s201
          %s203 = sshll.u32 [#allocation3], 4
          %s204 = int_to_ptr.vmem [resolvable:$true] %s203
          %206 = dma.hbm_to_vmem [thread:$0]  %s202, 128, %s204, [#allocation4]
        $region16: #{tpu_custom_call.1} parent=11 // pred_fallthru
          _
        // Predicated region
        $region17: #{tpu_custom_call.1} parent=11 // pred_check
          %p207 = pneg %p60
        $region18: #{tpu_custom_call.1} parent=11 // pred_check_branch
          %209 = sbr.rel (%p207) target = $region20
        $region19: #{tpu_custom_call.1} parent=11 // pred_region
          %211 = vsyncadd [#allocation7], 0
          %s213 = sshll.u32 %s1, 4
          %s214 = int_to_ptr.hbm [resolvable:$true] %s213
          %s215 = sshll.u32 [#allocation6], 4
          %s216 = int_to_ptr.vmem [resolvable:$true] %s215
          %218 = dma.hbm_to_vmem [thread:$0]  %s214, 128, %s216, [#allocation7]
        $region20: #{tpu_custom_call.1} parent=11 // pred_fallthru
          _
        // Predicated region
        $region21: #{tpu_custom_call.1} parent=11 // pred_check
          %p219 = pneg %p81
        $region22: #{tpu_custom_call.1} parent=11 // pred_check_branch
          %221 = sbr.rel (%p219) target = $region24
        $region23: #{tpu_custom_call.1} parent=11 // pred_region
          %223 = vsyncadd [#allocation7], 0
          %s224 = sshll.u32 %s2, 4
          %s225 = int_to_ptr.hbm [resolvable:$true] %s224
          %s226 = sshll.u32 [#allocation8], 4
          %s227 = int_to_ptr.vmem [resolvable:$true] %s226
          %232 = dma.hbm_to_vmem [thread:$0]  %s225, 2048, %s227, [#allocation7], 512, 512, 32
        $region24: #{tpu_custom_call.1} parent=11 // pred_fallthru
          _
        // Predicated region
        $region25: #{tpu_custom_call.1} parent=11 // pred_check
          %p233 = pneg %p102
        $region26: #{tpu_custom_call.1} parent=11 // pred_check_branch
          %235 = sbr.rel (%p233) target = $region28
        $region27: #{tpu_custom_call.1} parent=11 // pred_region
          %237 = vsyncadd [#allocation10], 0
          %s239 = sshll.u32 %s3, 4
          %s240 = int_to_ptr.hbm [resolvable:$true] %s239
          %s241 = sshll.u32 [#allocation9], 4
          %s242 = int_to_ptr.vmem [resolvable:$true] %s241
          %244 = dma.hbm_to_vmem [thread:$0]  %s240, 128, %s242, [#allocation10]
        $region28: #{tpu_custom_call.1} parent=11 // pred_fallthru
          _
      $region12: #{tpu_custom_call.1} parent=5 // pred_fallthru
        _
      %p245 = scmp.lt.s32.totalorder %s18, 3
      // Predicated region
      $region29: #{tpu_custom_call.1} parent=5 // pred_check
        %p246 = pneg %p245
      $region30: #{tpu_custom_call.1} parent=5 // pred_check_branch
        %248 = sbr.rel (%p246) target = $region32
      $region31: #{tpu_custom_call.1} parent=5 // pred_region
        // Predicated region
        $region33: #{tpu_custom_call.1} parent=31 // pred_check
          %p249 = pneg %p122
        $region34: #{tpu_custom_call.1} parent=31 // pred_check_branch
          %251 = sbr.rel (%p249) target = $region36
        $region35: #{tpu_custom_call.1} parent=31 // pred_region
          %s252 = sand.u32 %s18, 1
          %s253 = scalar_lea.sflag [#allocation4], %s252
          %s254 = sand.u32 %s112, 1
          %s255 = smul.addr %s254, 512
          %s256 = scalar_lea.vmem [#allocation11], %s255
          %258 = vsyncadd %s253, 0
          %s259 = smul.addr %s18, 4
          %s260 = scalar_lea.hbm %s4, %s259
          %s261 = sshll.u32 %s260, 4
          %s262 = int_to_ptr.hbm [resolvable:$true] %s261
          %s263 = sshll.u32 %s256, 4
          %s264 = int_to_ptr.vmem [resolvable:$true] %s263
          %269 = dma.hbm_to_vmem [thread:$0]  %s262, 8192, %s264, %s253, 192, 64, 4
        $region36: #{tpu_custom_call.1} parent=31 // pred_fallthru
          _
        // Predicated region
        $region37: #{tpu_custom_call.1} parent=31 // pred_check
          %p270 = pneg %p148
        $region38: #{tpu_custom_call.1} parent=31 // pred_check_branch
          %272 = sbr.rel (%p270) target = $region40
        $region39: #{tpu_custom_call.1} parent=31 // pred_region
          %p273 = scmp.lt.s32.totalorder %s18, 2
          %s274 = scalar_select %p273, %s18, 2
          %s275 = scalar_lea.vmem %s5, %s274
        $region40: #{tpu_custom_call.1} parent=31 // pred_fallthru
          _
      $region32: #{tpu_custom_call.1} parent=5 // pred_fallthru
        _
      %p276 = scmp.le.s32.totalorder 1, %s18
      %p277 = scmp.lt.s32.totalorder %s18, 4
      %p278 = pnand %p276, %p277
      %p279 = pneg %p278
      // Predicated region
      $region41: #{tpu_custom_call.1} parent=5 // pred_check
        _
      $region42: #{tpu_custom_call.1} parent=5 // pred_check_branch
        %281 = sbr.rel (%p278) target = $region44
      $region43: #{tpu_custom_call.1} parent=5 // pred_region
        %s282 = ssub.s32 %s18, 1
        // Predicated region
        $region45: #{tpu_custom_call.1} parent=43 // pred_check
          %p283 = pneg %p39
        $region46: #{tpu_custom_call.1} parent=43 // pred_check_branch
          %285 = sbr.rel (%p283) target = $region48
        $region47: #{tpu_custom_call.1} parent=43 // pred_region
          %287 = dma.done [#allocation4], 128
        $region48: #{tpu_custom_call.1} parent=43 // pred_fallthru
          _
        // Predicated region
        $region49: #{tpu_custom_call.1} parent=43 // pred_check
          %p288 = pneg %p60
        $region50: #{tpu_custom_call.1} parent=43 // pred_check_branch
          %290 = sbr.rel (%p288) target = $region52
        $region51: #{tpu_custom_call.1} parent=43 // pred_region
          %292 = dma.done [#allocation7], 128
        $region52: #{tpu_custom_call.1} parent=43 // pred_fallthru
          _
        // Predicated region
        $region53: #{tpu_custom_call.1} parent=43 // pred_check
          %p293 = pneg %p81
        $region54: #{tpu_custom_call.1} parent=43 // pred_check_branch
          %295 = sbr.rel (%p293) target = $region56
        $region55: #{tpu_custom_call.1} parent=43 // pred_region
          %297 = dma.done [#allocation7], 2048
        $region56: #{tpu_custom_call.1} parent=43 // pred_fallthru
          _
        // Predicated region
        $region57: #{tpu_custom_call.1} parent=43 // pred_check
          %p298 = pneg %p102
        $region58: #{tpu_custom_call.1} parent=43 // pred_check_branch
          %300 = sbr.rel (%p298) target = $region60
        $region59: #{tpu_custom_call.1} parent=43 // pred_region
          %302 = dma.done [#allocation10], 128
        $region60: #{tpu_custom_call.1} parent=43 // pred_fallthru
          _
        %s303 = sand.u32 %s23, 1
        %s304 = scalar_lea.sflag [#allocation4], %s303
        %s305 = sand.u32 %s115, 1
        %s306 = smul.addr %s305, 512
        %s307 = scalar_lea.vmem [#allocation11], %s306
        // Predicated region
        $region61: #{tpu_custom_call.1} parent=43 // pred_check
          %p308 = pneg %p128
        $region62: #{tpu_custom_call.1} parent=43 // pred_check_branch
          %310 = sbr.rel (%p308) target = $region64
        $region63: #{tpu_custom_call.1} parent=43 // pred_region
          %312 = dma.done %s304, 8192
        $region64: #{tpu_custom_call.1} parent=43 // pred_fallthru
          _
        %p313 = pneg %p39
        %p314 = pneg %p36
        %p315 = pneg %p60
        %p316 = pneg %p57
        %p317 = pneg %p81
        %p318 = pneg %p78
        %p319 = pneg %p102
        %p320 = pneg %p99
        %s321 = sand.u32 %s23, 1
        %s322 = scalar_lea.sflag [#allocation4], %s321
        %s323 = sand.u32 %s115, 1
        %s324 = smul.addr %s323, 512
        %s325 = scalar_lea.vmem [#allocation11], %s324
        %p326 = pneg %p128
        %p327 = pneg %p125
        %p328 = scmp.lt.s32.totalorder %s23, 2
        %s329 = scalar_select %p328, %s23, 2
        %s330 = scalar_lea.vmem %s5, %s329
        %p331 = pneg %p154
        %p332 = pneg %p151
        %p333 = pneg %p180
        %p334 = pneg %p177
        %s335 = sand.u32 %s167, 1
        %s336 = scalar_lea.sflag [#allocation5], %s335
        %s337 = sand.u32 %s167, 1
        %s338 = scalar_lea.vmem [#allocation12], %s337
        %p339 = scmp.lt.s32.totalorder %s23, 2
        %s340 = scalar_select %p339, %s23, 2
        %s341 = scalar_lea.vmem %s5, %s340
        %p342 = scmp.eq.s32.totalorder %s23, 0
        // Predicated region
        $region65: #{tpu_custom_call.1} parent=43 // pred_check
          %p343 = pneg %p342
        $region66: #{tpu_custom_call.1} parent=43 // pred_check_branch
          %345 = sbr.rel (%p343) target = $region68
        $region67: #{tpu_custom_call.1} parent=43 // pred_region
          %v346 = vld [vmem:[#allocation3] sm:$0xff]
          %v347 = vld [vmem:[#allocation6] sm:$0xff]
          %v348 = vmul.f32 %v346, %v347
          %vm349 = vcmask 261120
          %v350 = vsel %vm349, %v348, 0.0
          %351 = vadd.xlane.f32.xlu0 %v350
          %v352 = vpop.xlane.xlu0 %351
          %v353 = vmul.f32 %v352, 0.17677669
          %v354 = vrot.slane %v353, 4
          %v355 = vmax.f32 %v353, %v354
          %v356 = vrot.slane %v355, 2
          %v357 = vmax.f32 %v355, %v356
          %v358 = vrot.slane %v357, 1
          %v359 = vmax.f32 %v357, %v358
          %s360 = vtos %v359
          %v361 = vstv %s360
          %v362 = vsub.f32 %v353, %v361
          %v363 = vmul.f32 %v362, 1.442695
          %v364 = vpow.pop %v363
          %vm365 = vcmask 7168
          %v366 = vsel %vm365, %v364, 0.0
          %367 = vadd.xlane.f32.xlu0 %v366
          %v368 = vpop.xlane.xlu0 %367
          %v369 = vrot.slane %v368, 4
          %v370 = vadd.f32 %v368, %v369
          %v371 = vrot.slane %v370, 2
          %v372 = vadd.f32 %v370, %v371
          %v373 = vrot.slane %v372, 1
          %v374 = vadd.f32 %v372, %v373
          %s375 = vtos %v374
          %v376 = vstv %s375
          %v377 = vrcp.pop %v376
          %v378 = vmul.f32 %v376, %v377
          %v379 = vsub.f32 1.0, %v378
          %v380 = vmul.f32 %v377, %v379
          %v381 = vadd.f32 %v377, %v380
          %vm382 = vweird.f32 %v376
          %vm383 = vweird.f32 %v377
          %vm384 = vmor %vm382, %vm383
          %v385 = vsel %vm384, %v377, %v381
          %v386 = vand.u32 2147483647, %v376
          %vm387 = vcmp.eq.f32.partialorder %v386, 8.507059e+37
          %v388 = vand.u32 %v376, 2147483648
          %v389 = vor.u32 1.1754944e-38, %v388
          %v390 = vsel %vm387, %v389, %v385
          %v391 = vmul.f32 %v364, %v390
          %v392 = vmul.f32 %v391, %v347
          %v393 = vsel %vm349, %v392, 0.0
          %v394 = vrot.slane %v393, 4
          %v395 = vadd.f32 %v393, %v394
          %v396 = vrot.slane %v395, 2
          %v397 = vadd.f32 %v395, %v396
          %v398 = vrot.slane %v397, 1
          %v399 = vadd.f32 %v397, %v398
          %v400 = vld [vmem:[#allocation8] sm:$0xff]
          %v401 = vld [vmem:[#allocation8 + $0x8] sm:$0xff]
          %v402 = vld [vmem:[#allocation8 + $0x10] sm:$0xff]
          %v403 = vld [vmem:[#allocation8 + $0x18] sm:$0xff]
          %v404 = vld [vmem:[#allocation8 + $0x20] sm:$0xff]
          %v405 = vld [vmem:[#allocation8 + $0x28] sm:$0xff]
          %v406 = vld [vmem:[#allocation8 + $0x30] sm:$0xff]
          %v407 = vld [vmem:[#allocation8 + $0x38] sm:$0xff]
          %v408 = vld [vmem:[#allocation8 + $0x40] sm:$0xff]
          %v409 = vld [vmem:[#allocation8 + $0x48] sm:$0xff]
          %v410 = vld [vmem:[#allocation8 + $0x50] sm:$0xff]
          %v411 = vld [vmem:[#allocation8 + $0x58] sm:$0xff]
          %v412 = vld [vmem:[#allocation8 + $0x60] sm:$0xff]
          %v413 = vld [vmem:[#allocation8 + $0x68] sm:$0xff]
          %v414 = vld [vmem:[#allocation8 + $0x70] sm:$0xff]
          %v415 = vld [vmem:[#allocation8 + $0x78] sm:$0xff]
          %v416 = vunpack.c.l.bf16 %v400
          %v417 = vunpack.c.h.bf16 %v400
          %v418 = vunpack.c.l.bf16 %v401
          %v419 = vunpack.c.h.bf16 %v401
          %v420 = vunpack.c.l.bf16 %v402
          %v421 = vunpack.c.h.bf16 %v402
          %v422 = vunpack.c.l.bf16 %v403
          %v423 = vunpack.c.h.bf16 %v403
          %v424 = vunpack.c.l.bf16 %v404
          %v425 = vunpack.c.h.bf16 %v404
          %v426 = vunpack.c.l.bf16 %v405
          %v427 = vunpack.c.h.bf16 %v405
          %v428 = vunpack.c.l.bf16 %v406
          %v429 = vunpack.c.h.bf16 %v406
          %v430 = vunpack.c.l.bf16 %v407
          %v431 = vunpack.c.h.bf16 %v407
          %v432 = vunpack.c.l.bf16 %v408
          %v433 = vunpack.c.h.bf16 %v408
          %v434 = vunpack.c.l.bf16 %v409
          %v435 = vunpack.c.h.bf16 %v409
          %v436 = vunpack.c.l.bf16 %v410
          %v437 = vunpack.c.h.bf16 %v410
          %v438 = vunpack.c.l.bf16 %v411
          %v439 = vunpack.c.h.bf16 %v411
          %v440 = vunpack.c.l.bf16 %v412
          %v441 = vunpack.c.h.bf16 %v412
          %v442 = vunpack.c.l.bf16 %v413
          %v443 = vunpack.c.h.bf16 %v413
          %v444 = vunpack.c.l.bf16 %v414
          %v445 = vunpack.c.h.bf16 %v414
          %v446 = vunpack.c.l.bf16 %v415
          %v447 = vunpack.c.h.bf16 %v415
          %v448 = vld [vmem:[#allocation9] sm:$0xff]
          %v450 = vperm.slane %v448, 0
          %v451 = vperm.slane %v448, 1
          %v452 = vperm.slane %v448, 2
          %v453 = vperm.slane %v448, 3
          %v454 = vperm.slane %v448, 4
          %v455 = vperm.slane %v448, 5
          %v456 = vperm.slane %v448, 6
          %v457 = vperm.slane %v448, 7
          %v467 = vsel %vm349, %v399, 0
          %469 = vmatpush.msra.mxu0 0.0
          %470 = vmatpush.msra.mxu0 0.0
          %471 = vmatpush.msra.mxu0 0.0
          %472 = vmatpush.msra.mxu0 0.0
          %473 = vmatpush.msra.mxu0 0.0
          %474 = vmatpush.msra.mxu0 0.0
          %475 = vmatpush.msra.mxu0 0.0
          %476 = vmatpush.msra.mxu0 0.0
          %477 = vmatpush.msra.mxu0 0.0
          %478 = vmatpush.msra.mxu0 0.0
          %479 = vmatpush.msra.mxu0 0.0
          %480 = vmatpush.msra.mxu0 0.0
          %481 = vmatpush.msra.mxu0 %v440
          %482 = vmatpush.msra.mxu0 %v432
          %483 = vmatpush.msra.mxu0 %v424
          %484 = vmatpush.msra.mxu0 %v416
          %485 = vmatmul.f32.gmra.mxu0 %v467
          %v486 = vpop.f32.mrf.mxu0
          %v487 = vadd.f32 %v450, %v486
          %488 = vdwg.mxu0
          %489 = vmatpush.msra.mxu0 0.0
          %490 = vmatpush.msra.mxu0 0.0
          %491 = vmatpush.msra.mxu0 0.0
          %492 = vmatpush.msra.mxu0 0.0
          %493 = vmatpush.msra.mxu0 0.0
          %494 = vmatpush.msra.mxu0 0.0
          %495 = vmatpush.msra.mxu0 0.0
          %496 = vmatpush.msra.mxu0 0.0
          %497 = vmatpush.msra.mxu0 0.0
          %498 = vmatpush.msra.mxu0 0.0
          %499 = vmatpush.msra.mxu0 0.0
          %500 = vmatpush.msra.mxu0 0.0
          %501 = vmatpush.msra.mxu0 %v441
          %502 = vmatpush.msra.mxu0 %v433
          %503 = vmatpush.msra.mxu0 %v425
          %504 = vmatpush.msra.mxu0 %v417
          %505 = vmatmul.f32.gmra.mxu0 %v467
          %v506 = vpop.f32.mrf.mxu0
          %v507 = vadd.f32 %v451, %v506
          %508 = vdwg.mxu0
          %509 = vmatpush.msra.mxu0 0.0
          %510 = vmatpush.msra.mxu0 0.0
          %511 = vmatpush.msra.mxu0 0.0
          %512 = vmatpush.msra.mxu0 0.0
          %513 = vmatpush.msra.mxu0 0.0
          %514 = vmatpush.msra.mxu0 0.0
          %515 = vmatpush.msra.mxu0 0.0
          %516 = vmatpush.msra.mxu0 0.0
          %517 = vmatpush.msra.mxu0 0.0
          %518 = vmatpush.msra.mxu0 0.0
          %519 = vmatpush.msra.mxu0 0.0
          %520 = vmatpush.msra.mxu0 0.0
          %521 = vmatpush.msra.mxu0 %v442
          %522 = vmatpush.msra.mxu0 %v434
          %523 = vmatpush.msra.mxu0 %v426
          %524 = vmatpush.msra.mxu0 %v418
          %525 = vmatmul.f32.gmra.mxu0 %v467
          %v526 = vpop.f32.mrf.mxu0
          %v527 = vadd.f32 %v452, %v526
          %528 = vdwg.mxu0
          %529 = vmatpush.msra.mxu0 0.0
          %530 = vmatpush.msra.mxu0 0.0
          %531 = vmatpush.msra.mxu0 0.0
          %532 = vmatpush.msra.mxu0 0.0
          %533 = vmatpush.msra.mxu0 0.0
          %534 = vmatpush.msra.mxu0 0.0
          %535 = vmatpush.msra.mxu0 0.0
          %536 = vmatpush.msra.mxu0 0.0
          %537 = vmatpush.msra.mxu0 0.0
          %538 = vmatpush.msra.mxu0 0.0
          %539 = vmatpush.msra.mxu0 0.0
          %540 = vmatpush.msra.mxu0 0.0
          %541 = vmatpush.msra.mxu0 %v443
          %542 = vmatpush.msra.mxu0 %v435
          %543 = vmatpush.msra.mxu0 %v427
          %544 = vmatpush.msra.mxu0 %v419
          %545 = vmatmul.f32.gmra.mxu0 %v467
          %v546 = vpop.f32.mrf.mxu0
          %v547 = vadd.f32 %v453, %v546
          %548 = vdwg.mxu0
          %549 = vmatpush.msra.mxu0 0.0
          %550 = vmatpush.msra.mxu0 0.0
          %551 = vmatpush.msra.mxu0 0.0
          %552 = vmatpush.msra.mxu0 0.0
          %553 = vmatpush.msra.mxu0 0.0
          %554 = vmatpush.msra.mxu0 0.0
          %555 = vmatpush.msra.mxu0 0.0
          %556 = vmatpush.msra.mxu0 0.0
          %557 = vmatpush.msra.mxu0 0.0
          %558 = vmatpush.msra.mxu0 0.0
          %559 = vmatpush.msra.mxu0 0.0
          %560 = vmatpush.msra.mxu0 0.0
          %561 = vmatpush.msra.mxu0 %v444
          %562 = vmatpush.msra.mxu0 %v436
          %563 = vmatpush.msra.mxu0 %v428
          %564 = vmatpush.msra.mxu0 %v420
          %565 = vmatmul.f32.gmra.mxu0 %v467
          %v566 = vpop.f32.mrf.mxu0
          %v567 = vadd.f32 %v454, %v566
          %568 = vdwg.mxu0
          %569 = vmatpush.msra.mxu0 0.0
          %570 = vmatpush.msra.mxu0 0.0
          %571 = vmatpush.msra.mxu0 0.0
          %572 = vmatpush.msra.mxu0 0.0
          %573 = vmatpush.msra.mxu0 0.0
          %574 = vmatpush.msra.mxu0 0.0
          %575 = vmatpush.msra.mxu0 0.0
          %576 = vmatpush.msra.mxu0 0.0
          %577 = vmatpush.msra.mxu0 0.0
          %578 = vmatpush.msra.mxu0 0.0
          %579 = vmatpush.msra.mxu0 0.0
          %580 = vmatpush.msra.mxu0 0.0
          %581 = vmatpush.msra.mxu0 %v445
          %582 = vmatpush.msra.mxu0 %v437
          %583 = vmatpush.msra.mxu0 %v429
          %584 = vmatpush.msra.mxu0 %v421
          %585 = vmatmul.f32.gmra.mxu0 %v467
          %v586 = vpop.f32.mrf.mxu0
          %v587 = vadd.f32 %v455, %v586
          %588 = vdwg.mxu0
          %589 = vmatpush.msra.mxu0 0.0
          %590 = vmatpush.msra.mxu0 0.0
          %591 = vmatpush.msra.mxu0 0.0
          %592 = vmatpush.msra.mxu0 0.0
          %593 = vmatpush.msra.mxu0 0.0
          %594 = vmatpush.msra.mxu0 0.0
          %595 = vmatpush.msra.mxu0 0.0
          %596 = vmatpush.msra.mxu0 0.0
          %597 = vmatpush.msra.mxu0 0.0
          %598 = vmatpush.msra.mxu0 0.0
          %599 = vmatpush.msra.mxu0 0.0
          %600 = vmatpush.msra.mxu0 0.0
          %601 = vmatpush.msra.mxu0 %v446
          %602 = vmatpush.msra.mxu0 %v438
          %603 = vmatpush.msra.mxu0 %v430
          %604 = vmatpush.msra.mxu0 %v422
          %605 = vmatmul.f32.gmra.mxu0 %v467
          %v606 = vpop.f32.mrf.mxu0
          %v607 = vadd.f32 %v456, %v606
          %608 = vdwg.mxu0
          %609 = vmatpush.msra.mxu0 0.0
          %610 = vmatpush.msra.mxu0 0.0
          %611 = vmatpush.msra.mxu0 0.0
          %612 = vmatpush.msra.mxu0 0.0
          %613 = vmatpush.msra.mxu0 0.0
          %614 = vmatpush.msra.mxu0 0.0
          %615 = vmatpush.msra.mxu0 0.0
          %616 = vmatpush.msra.mxu0 0.0
          %617 = vmatpush.msra.mxu0 0.0
          %618 = vmatpush.msra.mxu0 0.0
          %619 = vmatpush.msra.mxu0 0.0
          %620 = vmatpush.msra.mxu0 0.0
          %621 = vmatpush.msra.mxu0 %v447
          %622 = vmatpush.msra.mxu0 %v439
          %623 = vmatpush.msra.mxu0 %v431
          %624 = vmatpush.msra.mxu0 %v423
          %625 = vmatmul.f32.gmra.mxu0 %v467
          %v626 = vpop.f32.mrf.mxu0
          %v627 = vadd.f32 %v457, %v626
          %628 = vdwg.mxu0
          %v637 = vrot.slane %v507, 7
          %v638 = vrot.slane %v527, 6
          %v639 = vrot.slane %v547, 5
          %v640 = vrot.slane %v567, 4
          %v641 = vrot.slane %v587, 3
          %v642 = vrot.slane %v607, 2
          %v643 = vrot.slane %v627, 1
          %vm644 = vcmask 1040384
          %v645 = vsel %vm644, %v487, %v637
          %vm646 = vcmask 1042434
          %v647 = vsel %vm646, %v638, %v639
          %vm648 = vcmask 1041408
          %v649 = vsel %vm648, %v645, %v647
          %vm650 = vcmask 1044484
          %v651 = vsel %vm650, %v640, %v641
          %vm652 = vcmask 1046534
          %v653 = vsel %vm652, %v642, %v643
          %vm654 = vcmask 1045508
          %v655 = vsel %vm654, %v651, %v653
          %vm656 = vcmask 1043456
          %v657 = vsel %vm656, %v649, %v655
          %659 = vst [vmem:[#allocation2] sm:$0xff] %v657
        $region68: #{tpu_custom_call.1} parent=43 // pred_fallthru
          _
        %v660 = vld [vmem:[#allocation2] sm:$0xff]
        %v661 = vld [vmem:[%s307] sm:$0xf]
        %v662 = vld [vmem:[%s307 + $0x4] sm:$0xf]
        %v663 = vld [vmem:[%s307 + $0x8] sm:$0xf]
        %v664 = vld [vmem:[%s307 + $0xc] sm:$0xf]
        %v665 = vld [vmem:[%s307 + $0x10] sm:$0xf]
        %v666 = vld [vmem:[%s307 + $0x14] sm:$0xf]
        %v667 = vld [vmem:[%s307 + $0x18] sm:$0xf]
        %v668 = vld [vmem:[%s307 + $0x1c] sm:$0xf]
        %v669 = vld [vmem:[%s307 + $0x20] sm:$0xf]
        %v670 = vld [vmem:[%s307 + $0x24] sm:$0xf]
        %v671 = vld [vmem:[%s307 + $0x28] sm:$0xf]
        %v672 = vld [vmem:[%s307 + $0x2c] sm:$0xf]
        %v673 = vld [vmem:[%s307 + $0x30] sm:$0xf]
        %v674 = vld [vmem:[%s307 + $0x34] sm:$0xf]
        %v675 = vld [vmem:[%s307 + $0x38] sm:$0xf]
        %v676 = vld [vmem:[%s307 + $0x3c] sm:$0xf]
        %v677 = vld [vmem:[%s307 + $0x40] sm:$0xf]
        %v678 = vld [vmem:[%s307 + $0x44] sm:$0xf]
        %v679 = vld [vmem:[%s307 + $0x48] sm:$0xf]
        %v680 = vld [vmem:[%s307 + $0x4c] sm:$0xf]
        %v681 = vld [vmem:[%s307 + $0x50] sm:$0xf]
        %v682 = vld [vmem:[%s307 + $0x54] sm:$0xf]
        %v683 = vld [vmem:[%s307 + $0x58] sm:$0xf]
        %v684 = vld [vmem:[%s307 + $0x5c] sm:$0xf]
        %v685 = vld [vmem:[%s307 + $0x60] sm:$0xf]
        %v686 = vld [vmem:[%s307 + $0x64] sm:$0xf]
        %v687 = vld [vmem:[%s307 + $0x68] sm:$0xf]
        %v688 = vld [vmem:[%s307 + $0x6c] sm:$0xf]
        %v689 = vld [vmem:[%s307 + $0x70] sm:$0xf]
        %v690 = vld [vmem:[%s307 + $0x74] sm:$0xf]
        %v691 = vld [vmem:[%s307 + $0x78] sm:$0xf]
        %v692 = vld [vmem:[%s307 + $0x7c] sm:$0xf]
        %v693 = vld [vmem:[%s307 + $0x80] sm:$0xf]
        %v694 = vld [vmem:[%s307 + $0x84] sm:$0xf]
        %v695 = vld [vmem:[%s307 + $0x88] sm:$0xf]
        %v696 = vld [vmem:[%s307 + $0x8c] sm:$0xf]
        %v697 = vld [vmem:[%s307 + $0x90] sm:$0xf]
        %v698 = vld [vmem:[%s307 + $0x94] sm:$0xf]
        %v699 = vld [vmem:[%s307 + $0x98] sm:$0xf]
        %v700 = vld [vmem:[%s307 + $0x9c] sm:$0xf]
        %v701 = vld [vmem:[%s307 + $0xa0] sm:$0xf]
        %v702 = vld [vmem:[%s307 + $0xa4] sm:$0xf]
        %v703 = vld [vmem:[%s307 + $0xa8] sm:$0xf]
        %v704 = vld [vmem:[%s307 + $0xac] sm:$0xf]
        %v705 = vld [vmem:[%s307 + $0xb0] sm:$0xf]
        %v706 = vld [vmem:[%s307 + $0xb4] sm:$0xf]
        %v707 = vld [vmem:[%s307 + $0xb8] sm:$0xf]
        %v708 = vld [vmem:[%s307 + $0xbc] sm:$0xf]
        %v709 = vld [vmem:[%s307 + $0xc0] sm:$0xf]
        %v710 = vld [vmem:[%s307 + $0xc4] sm:$0xf]
        %v711 = vld [vmem:[%s307 + $0xc8] sm:$0xf]
        %v712 = vld [vmem:[%s307 + $0xcc] sm:$0xf]
        %v713 = vld [vmem:[%s307 + $0xd0] sm:$0xf]
        %v714 = vld [vmem:[%s307 + $0xd4] sm:$0xf]
        %v715 = vld [vmem:[%s307 + $0xd8] sm:$0xf]
        %v716 = vld [vmem:[%s307 + $0xdc] sm:$0xf]
        %v717 = vld [vmem:[%s307 + $0xe0] sm:$0xf]
        %v718 = vld [vmem:[%s307 + $0xe4] sm:$0xf]
        %v719 = vld [vmem:[%s307 + $0xe8] sm:$0xf]
        %v720 = vld [vmem:[%s307 + $0xec] sm:$0xf]
        %v721 = vld [vmem:[%s307 + $0xf0] sm:$0xf]
        %v722 = vld [vmem:[%s307 + $0xf4] sm:$0xf]
        %v723 = vld [vmem:[%s307 + $0xf8] sm:$0xf]
        %v724 = vld [vmem:[%s307 + $0xfc] sm:$0xf]
        %v725 = vld [vmem:[%s307 + $0x100] sm:$0xf]
        %v726 = vld [vmem:[%s307 + $0x104] sm:$0xf]
        %v727 = vld [vmem:[%s307 + $0x108] sm:$0xf]
        %v728 = vld [vmem:[%s307 + $0x10c] sm:$0xf]
        %v729 = vld [vmem:[%s307 + $0x110] sm:$0xf]
        %v730 = vld [vmem:[%s307 + $0x114] sm:$0xf]
        %v731 = vld [vmem:[%s307 + $0x118] sm:$0xf]
        %v732 = vld [vmem:[%s307 + $0x11c] sm:$0xf]
        %v733 = vld [vmem:[%s307 + $0x120] sm:$0xf]
        %v734 = vld [vmem:[%s307 + $0x124] sm:$0xf]
        %v735 = vld [vmem:[%s307 + $0x128] sm:$0xf]
        %v736 = vld [vmem:[%s307 + $0x12c] sm:$0xf]
        %v737 = vld [vmem:[%s307 + $0x130] sm:$0xf]
        %v738 = vld [vmem:[%s307 + $0x134] sm:$0xf]
        %v739 = vld [vmem:[%s307 + $0x138] sm:$0xf]
        %v740 = vld [vmem:[%s307 + $0x13c] sm:$0xf]
        %v741 = vld [vmem:[%s307 + $0x140] sm:$0xf]
        %v742 = vld [vmem:[%s307 + $0x144] sm:$0xf]
        %v743 = vld [vmem:[%s307 + $0x148] sm:$0xf]
        %v744 = vld [vmem:[%s307 + $0x14c] sm:$0xf]
        %v745 = vld [vmem:[%s307 + $0x150] sm:$0xf]
        %v746 = vld [vmem:[%s307 + $0x154] sm:$0xf]
        %v747 = vld [vmem:[%s307 + $0x158] sm:$0xf]
        %v748 = vld [vmem:[%s307 + $0x15c] sm:$0xf]
        %v749 = vld [vmem:[%s307 + $0x160] sm:$0xf]
        %v750 = vld [vmem:[%s307 + $0x164] sm:$0xf]
        %v751 = vld [vmem:[%s307 + $0x168] sm:$0xf]
        %v752 = vld [vmem:[%s307 + $0x16c] sm:$0xf]
        %v753 = vld [vmem:[%s307 + $0x170] sm:$0xf]
        %v754 = vld [vmem:[%s307 + $0x174] sm:$0xf]
        %v755 = vld [vmem:[%s307 + $0x178] sm:$0xf]
        %v756 = vld [vmem:[%s307 + $0x17c] sm:$0xf]
        %v757 = vld [vmem:[%s307 + $0x180] sm:$0xf]
        %v758 = vld [vmem:[%s307 + $0x184] sm:$0xf]
        %v759 = vld [vmem:[%s307 + $0x188] sm:$0xf]
        %v760 = vld [vmem:[%s307 + $0x18c] sm:$0xf]
        %v761 = vld [vmem:[%s307 + $0x190] sm:$0xf]
        %v762 = vld [vmem:[%s307 + $0x194] sm:$0xf]
        %v763 = vld [vmem:[%s307 + $0x198] sm:$0xf]
        %v764 = vld [vmem:[%s307 + $0x19c] sm:$0xf]
        %v765 = vld [vmem:[%s307 + $0x1a0] sm:$0xf]
        %v766 = vld [vmem:[%s307 + $0x1a4] sm:$0xf]
        %v767 = vld [vmem:[%s307 + $0x1a8] sm:$0xf]
        %v768 = vld [vmem:[%s307 + $0x1ac] sm:$0xf]
        %v769 = vld [vmem:[%s307 + $0x1b0] sm:$0xf]
        %v770 = vld [vmem:[%s307 + $0x1b4] sm:$0xf]
        %v771 = vld [vmem:[%s307 + $0x1b8] sm:$0xf]
        %v772 = vld [vmem:[%s307 + $0x1bc] sm:$0xf]
        %v773 = vld [vmem:[%s307 + $0x1c0] sm:$0xf]
        %v774 = vld [vmem:[%s307 + $0x1c4] sm:$0xf]
        %v775 = vld [vmem:[%s307 + $0x1c8] sm:$0xf]
        %v776 = vld [vmem:[%s307 + $0x1cc] sm:$0xf]
        %v777 = vld [vmem:[%s307 + $0x1d0] sm:$0xf]
        %v778 = vld [vmem:[%s307 + $0x1d4] sm:$0xf]
        %v779 = vld [vmem:[%s307 + $0x1d8] sm:$0xf]
        %v780 = vld [vmem:[%s307 + $0x1dc] sm:$0xf]
        %v781 = vld [vmem:[%s307 + $0x1e0] sm:$0xf]
        %v782 = vld [vmem:[%s307 + $0x1e4] sm:$0xf]
        %v783 = vld [vmem:[%s307 + $0x1e8] sm:$0xf]
        %v784 = vld [vmem:[%s307 + $0x1ec] sm:$0xf]
        %v785 = vld [vmem:[%s307 + $0x1f0] sm:$0xf]
        %v786 = vld [vmem:[%s307 + $0x1f4] sm:$0xf]
        %v787 = vld [vmem:[%s307 + $0x1f8] sm:$0xf]
        %v788 = vld [vmem:[%s307 + $0x1fc] sm:$0xf]
        %v789 = vunpack.c.l.bf16 %v661
        %v790 = vunpack.c.l.bf16 %v662
        %v791 = vunpack.c.l.bf16 %v663
        %v792 = vunpack.c.l.bf16 %v664
        %v793 = vunpack.c.l.bf16 %v665
        %v794 = vunpack.c.l.bf16 %v666
        %v795 = vunpack.c.l.bf16 %v667
        %v796 = vunpack.c.l.bf16 %v668
        %v797 = vunpack.c.l.bf16 %v669
        %v798 = vunpack.c.l.bf16 %v670
        %v799 = vunpack.c.l.bf16 %v671
        %v800 = vunpack.c.l.bf16 %v672
        %v801 = vunpack.c.l.bf16 %v673
        %v802 = vunpack.c.l.bf16 %v674
        %v803 = vunpack.c.l.bf16 %v675
        %v804 = vunpack.c.l.bf16 %v676
        %v805 = vunpack.c.l.bf16 %v677
        %v806 = vunpack.c.l.bf16 %v678
        %v807 = vunpack.c.l.bf16 %v679
        %v808 = vunpack.c.l.bf16 %v680
        %v809 = vunpack.c.l.bf16 %v681
        %v810 = vunpack.c.l.bf16 %v682
        %v811 = vunpack.c.l.bf16 %v683
        %v812 = vunpack.c.l.bf16 %v684
        %v813 = vunpack.c.l.bf16 %v685
        %v814 = vunpack.c.l.bf16 %v686
        %v815 = vunpack.c.l.bf16 %v687
        %v816 = vunpack.c.l.bf16 %v688
        %v817 = vunpack.c.l.bf16 %v689
        %v818 = vunpack.c.l.bf16 %v690
        %v819 = vunpack.c.l.bf16 %v691
        %v820 = vunpack.c.l.bf16 %v692
        %v821 = vunpack.c.l.bf16 %v693
        %v822 = vunpack.c.l.bf16 %v694
        %v823 = vunpack.c.l.bf16 %v695
        %v824 = vunpack.c.l.bf16 %v696
        %v825 = vunpack.c.l.bf16 %v697
        %v826 = vunpack.c.l.bf16 %v698
        %v827 = vunpack.c.l.bf16 %v699
        %v828 = vunpack.c.l.bf16 %v700
        %v829 = vunpack.c.l.bf16 %v701
        %v830 = vunpack.c.l.bf16 %v702
        %v831 = vunpack.c.l.bf16 %v703
        %v832 = vunpack.c.l.bf16 %v704
        %v833 = vunpack.c.l.bf16 %v705
        %v834 = vunpack.c.l.bf16 %v706
        %v835 = vunpack.c.l.bf16 %v707
        %v836 = vunpack.c.l.bf16 %v708
        %v837 = vunpack.c.l.bf16 %v709
        %v838 = vunpack.c.l.bf16 %v710
        %v839 = vunpack.c.l.bf16 %v711
        %v840 = vunpack.c.l.bf16 %v712
        %v841 = vunpack.c.l.bf16 %v713
        %v842 = vunpack.c.l.bf16 %v714
        %v843 = vunpack.c.l.bf16 %v715
        %v844 = vunpack.c.l.bf16 %v716
        %v845 = vunpack.c.l.bf16 %v717
        %v846 = vunpack.c.l.bf16 %v718
        %v847 = vunpack.c.l.bf16 %v719
        %v848 = vunpack.c.l.bf16 %v720
        %v849 = vunpack.c.l.bf16 %v721
        %v850 = vunpack.c.l.bf16 %v722
        %v851 = vunpack.c.l.bf16 %v723
        %v852 = vunpack.c.l.bf16 %v724
        %v853 = vunpack.c.l.bf16 %v725
        %v854 = vunpack.c.l.bf16 %v726
        %v855 = vunpack.c.l.bf16 %v727
        %v856 = vunpack.c.l.bf16 %v728
        %v857 = vunpack.c.l.bf16 %v729
        %v858 = vunpack.c.l.bf16 %v730
        %v859 = vunpack.c.l.bf16 %v731
        %v860 = vunpack.c.l.bf16 %v732
        %v861 = vunpack.c.l.bf16 %v733
        %v862 = vunpack.c.l.bf16 %v734
        %v863 = vunpack.c.l.bf16 %v735
        %v864 = vunpack.c.l.bf16 %v736
        %v865 = vunpack.c.l.bf16 %v737
        %v866 = vunpack.c.l.bf16 %v738
        %v867 = vunpack.c.l.bf16 %v739
        %v868 = vunpack.c.l.bf16 %v740
        %v869 = vunpack.c.l.bf16 %v741
        %v870 = vunpack.c.l.bf16 %v742
        %v871 = vunpack.c.l.bf16 %v743
        %v872 = vunpack.c.l.bf16 %v744
        %v873 = vunpack.c.l.bf16 %v745
        %v874 = vunpack.c.l.bf16 %v746
        %v875 = vunpack.c.l.bf16 %v747
        %v876 = vunpack.c.l.bf16 %v748
        %v877 = vunpack.c.l.bf16 %v749
        %v878 = vunpack.c.l.bf16 %v750
        %v879 = vunpack.c.l.bf16 %v751
        %v880 = vunpack.c.l.bf16 %v752
        %v881 = vunpack.c.l.bf16 %v753
        %v882 = vunpack.c.l.bf16 %v754
        %v883 = vunpack.c.l.bf16 %v755
        %v884 = vunpack.c.l.bf16 %v756
        %v885 = vunpack.c.l.bf16 %v757
        %v886 = vunpack.c.l.bf16 %v758
        %v887 = vunpack.c.l.bf16 %v759
        %v888 = vunpack.c.l.bf16 %v760
        %v889 = vunpack.c.l.bf16 %v761
        %v890 = vunpack.c.l.bf16 %v762
        %v891 = vunpack.c.l.bf16 %v763
        %v892 = vunpack.c.l.bf16 %v764
        %v893 = vunpack.c.l.bf16 %v765
        %v894 = vunpack.c.l.bf16 %v766
        %v895 = vunpack.c.l.bf16 %v767
        %v896 = vunpack.c.l.bf16 %v768
        %v897 = vunpack.c.l.bf16 %v769
        %v898 = vunpack.c.l.bf16 %v770
        %v899 = vunpack.c.l.bf16 %v771
        %v900 = vunpack.c.l.bf16 %v772
        %v901 = vunpack.c.l.bf16 %v773
        %v902 = vunpack.c.l.bf16 %v774
        %v903 = vunpack.c.l.bf16 %v775
        %v904 = vunpack.c.l.bf16 %v776
        %v905 = vunpack.c.l.bf16 %v777
        %v906 = vunpack.c.l.bf16 %v778
        %v907 = vunpack.c.l.bf16 %v779
        %v908 = vunpack.c.l.bf16 %v780
        %v909 = vunpack.c.l.bf16 %v781
        %v910 = vunpack.c.l.bf16 %v782
        %v911 = vunpack.c.l.bf16 %v783
        %v912 = vunpack.c.l.bf16 %v784
        %v913 = vunpack.c.l.bf16 %v785
        %v914 = vunpack.c.l.bf16 %v786
        %v915 = vunpack.c.l.bf16 %v787
        %v916 = vunpack.c.l.bf16 %v788
        %v917 = vld [vmem:[%s341] sm:$0x1]
        %v919 = vperm.slane %v660, 0
        %v920 = vperm.slane %v660, 1
        %v921 = vperm.slane %v660, 2
        %v922 = vperm.slane %v660, 3
        %v923 = vperm.slane %v660, 4
        %v924 = vperm.slane %v660, 5
        %v925 = vperm.slane %v660, 6
        %v926 = vperm.slane %v660, 7
        %935 = vmatpush.msra.mxu0 %v804
        %936 = vmatpush.msra.mxu0 %v803
        %937 = vmatpush.msra.mxu0 %v802
        %938 = vmatpush.msra.mxu0 %v801
        %939 = vmatpush.msra.mxu0 %v800
        %940 = vmatpush.msra.mxu0 %v799
        %941 = vmatpush.msra.mxu0 %v798
        %942 = vmatpush.msra.mxu0 %v797
        %943 = vmatpush.msra.mxu0 %v796
        %944 = vmatpush.msra.mxu0 %v795
        %945 = vmatpush.msra.mxu0 %v794
        %946 = vmatpush.msra.mxu0 %v793
        %947 = vmatpush.msra.mxu0 %v792
        %948 = vmatpush.msra.mxu0 %v791
        %949 = vmatpush.msra.mxu0 %v790
        %950 = vmatpush.msra.mxu0 %v789
        %951 = vmatmul.f32.gmra.mxu0 %v919
        %v952 = vpop.f32.mrf.mxu0
        %v953 = vadd.f32 %v917, %v952
        %954 = vdwg.mxu0
        %955 = vmatpush.msra.mxu0 %v820
        %956 = vmatpush.msra.mxu0 %v819
        %957 = vmatpush.msra.mxu0 %v818
        %958 = vmatpush.msra.mxu0 %v817
        %959 = vmatpush.msra.mxu0 %v816
        %960 = vmatpush.msra.mxu0 %v815
        %961 = vmatpush.msra.mxu0 %v814
        %962 = vmatpush.msra.mxu0 %v813
        %963 = vmatpush.msra.mxu0 %v812
        %964 = vmatpush.msra.mxu0 %v811
        %965 = vmatpush.msra.mxu0 %v810
        %966 = vmatpush.msra.mxu0 %v809
        %967 = vmatpush.msra.mxu0 %v808
        %968 = vmatpush.msra.mxu0 %v807
        %969 = vmatpush.msra.mxu0 %v806
        %970 = vmatpush.msra.mxu0 %v805
        %971 = vmatmul.f32.gmra.mxu0 %v920
        %v972 = vpop.f32.mrf.mxu0
        %v973 = vadd.f32 %v953, %v972
        %974 = vdwg.mxu0
        %975 = vmatpush.msra.mxu0 %v836
        %976 = vmatpush.msra.mxu0 %v835
        %977 = vmatpush.msra.mxu0 %v834
        %978 = vmatpush.msra.mxu0 %v833
        %979 = vmatpush.msra.mxu0 %v832
        %980 = vmatpush.msra.mxu0 %v831
        %981 = vmatpush.msra.mxu0 %v830
        %982 = vmatpush.msra.mxu0 %v829
        %983 = vmatpush.msra.mxu0 %v828
        %984 = vmatpush.msra.mxu0 %v827
        %985 = vmatpush.msra.mxu0 %v826
        %986 = vmatpush.msra.mxu0 %v825
        %987 = vmatpush.msra.mxu0 %v824
        %988 = vmatpush.msra.mxu0 %v823
        %989 = vmatpush.msra.mxu0 %v822
        %990 = vmatpush.msra.mxu0 %v821
        %991 = vmatmul.f32.gmra.mxu0 %v921
        %v992 = vpop.f32.mrf.mxu0
        %v993 = vadd.f32 %v973, %v992
        %994 = vdwg.mxu0
        %995 = vmatpush.msra.mxu0 %v852
        %996 = vmatpush.msra.mxu0 %v851
        %997 = vmatpush.msra.mxu0 %v850
        %998 = vmatpush.msra.mxu0 %v849
        %999 = vmatpush.msra.mxu0 %v848
        %1000 = vmatpush.msra.mxu0 %v847
        %1001 = vmatpush.msra.mxu0 %v846
        %1002 = vmatpush.msra.mxu0 %v845
        %1003 = vmatpush.msra.mxu0 %v844
        %1004 = vmatpush.msra.mxu0 %v843
        %1005 = vmatpush.msra.mxu0 %v842
        %1006 = vmatpush.msra.mxu0 %v841
        %1007 = vmatpush.msra.mxu0 %v840
        %1008 = vmatpush.msra.mxu0 %v839
        %1009 = vmatpush.msra.mxu0 %v838
        %1010 = vmatpush.msra.mxu0 %v837
        %1011 = vmatmul.f32.gmra.mxu0 %v922
        %v1012 = vpop.f32.mrf.mxu0
        %v1013 = vadd.f32 %v993, %v1012
        %1014 = vdwg.mxu0
        %1015 = vmatpush.msra.mxu0 %v868
        %1016 = vmatpush.msra.mxu0 %v867
        %1017 = vmatpush.msra.mxu0 %v866
        %1018 = vmatpush.msra.mxu0 %v865
        %1019 = vmatpush.msra.mxu0 %v864
        %1020 = vmatpush.msra.mxu0 %v863
        %1021 = vmatpush.msra.mxu0 %v862
        %1022 = vmatpush.msra.mxu0 %v861
        %1023 = vmatpush.msra.mxu0 %v860
        %1024 = vmatpush.msra.mxu0 %v859
        %1025 = vmatpush.msra.mxu0 %v858
        %1026 = vmatpush.msra.mxu0 %v857
        %1027 = vmatpush.msra.mxu0 %v856
        %1028 = vmatpush.msra.mxu0 %v855
        %1029 = vmatpush.msra.mxu0 %v854
        %1030 = vmatpush.msra.mxu0 %v853
        %1031 = vmatmul.f32.gmra.mxu0 %v923
        %v1032 = vpop.f32.mrf.mxu0
        %v1033 = vadd.f32 %v1013, %v1032
        %1034 = vdwg.mxu0
        %1035 = vmatpush.msra.mxu0 %v884
        %1036 = vmatpush.msra.mxu0 %v883
        %1037 = vmatpush.msra.mxu0 %v882
        %1038 = vmatpush.msra.mxu0 %v881
        %1039 = vmatpush.msra.mxu0 %v880
        %1040 = vmatpush.msra.mxu0 %v879
        %1041 = vmatpush.msra.mxu0 %v878
        %1042 = vmatpush.msra.mxu0 %v877
        %1043 = vmatpush.msra.mxu0 %v876
        %1044 = vmatpush.msra.mxu0 %v875
        %1045 = vmatpush.msra.mxu0 %v874
        %1046 = vmatpush.msra.mxu0 %v873
        %1047 = vmatpush.msra.mxu0 %v872
        %1048 = vmatpush.msra.mxu0 %v871
        %1049 = vmatpush.msra.mxu0 %v870
        %1050 = vmatpush.msra.mxu0 %v869
        %1051 = vmatmul.f32.gmra.mxu0 %v924
        %v1052 = vpop.f32.mrf.mxu0
        %v1053 = vadd.f32 %v1033, %v1052
        %1054 = vdwg.mxu0
        %1055 = vmatpush.msra.mxu0 %v900
        %1056 = vmatpush.msra.mxu0 %v899
        %1057 = vmatpush.msra.mxu0 %v898
        %1058 = vmatpush.msra.mxu0 %v897
        %1059 = vmatpush.msra.mxu0 %v896
        %1060 = vmatpush.msra.mxu0 %v895
        %1061 = vmatpush.msra.mxu0 %v894
        %1062 = vmatpush.msra.mxu0 %v893
        %1063 = vmatpush.msra.mxu0 %v892
        %1064 = vmatpush.msra.mxu0 %v891
        %1065 = vmatpush.msra.mxu0 %v890
        %1066 = vmatpush.msra.mxu0 %v889
        %1067 = vmatpush.msra.mxu0 %v888
        %1068 = vmatpush.msra.mxu0 %v887
        %1069 = vmatpush.msra.mxu0 %v886
        %1070 = vmatpush.msra.mxu0 %v885
        %1071 = vmatmul.f32.gmra.mxu0 %v925
        %v1072 = vpop.f32.mrf.mxu0
        %v1073 = vadd.f32 %v1053, %v1072
        %1074 = vdwg.mxu0
        %1075 = vmatpush.msra.mxu0 %v916
        %1076 = vmatpush.msra.mxu0 %v915
        %1077 = vmatpush.msra.mxu0 %v914
        %1078 = vmatpush.msra.mxu0 %v913
        %1079 = vmatpush.msra.mxu0 %v912
        %1080 = vmatpush.msra.mxu0 %v911
        %1081 = vmatpush.msra.mxu0 %v910
        %1082 = vmatpush.msra.mxu0 %v909
        %1083 = vmatpush.msra.mxu0 %v908
        %1084 = vmatpush.msra.mxu0 %v907
        %1085 = vmatpush.msra.mxu0 %v906
        %1086 = vmatpush.msra.mxu0 %v905
        %1087 = vmatpush.msra.mxu0 %v904
        %1088 = vmatpush.msra.mxu0 %v903
        %1089 = vmatpush.msra.mxu0 %v902
        %1090 = vmatpush.msra.mxu0 %v901
        %1091 = vmatmul.f32.gmra.mxu0 %v926
        %v1092 = vpop.f32.mrf.mxu0
        %v1093 = vadd.f32 %v1073, %v1092
        %1094 = vdwg.mxu0
        %v1095 = vxor.u32 %v1093, 2147483648
        %v1096 = vmul.f32 %v1095, 1.442695
        %v1097 = vpow.pop %v1096
        %v1098 = vadd.f32 %v1097, 1.0
        %v1099 = vrcp.pop %v1098
        %v1100 = vmul.f32 %v1098, %v1099
        %v1101 = vsub.f32 1.0, %v1100
        %v1102 = vmul.f32 %v1099, %v1101
        %v1103 = vadd.f32 %v1099, %v1102
        %vm1104 = vweird.f32 %v1098
        %vm1105 = vweird.f32 %v1099
        %vm1106 = vmor %vm1104, %vm1105
        %v1107 = vsel %vm1106, %v1099, %v1103
        %v1108 = vand.u32 2147483647, %v1098
        %vm1109 = vcmp.eq.f32.partialorder %v1108, 8.507059e+37
        %v1110 = vand.u32 %v1098, 2147483648
        %v1111 = vor.u32 1.1754944e-38, %v1110
        %v1112 = vsel %vm1109, %v1111, %v1107
        %v1113 = vmul.f32 1.0, %v1112
        %1114 = vst [vmem:[%s338] sm:$0x1] %v1113
        %s1115 = sand.u32 %s167, 1
        %s1116 = scalar_lea.sflag [#allocation5], %s1115
        %s1117 = sand.u32 %s167, 1
        %s1118 = scalar_lea.vmem [#allocation12], %s1117
        // Predicated region
        $region69: #{tpu_custom_call.1} parent=43 // pred_check
          %p1119 = pneg %p177
        $region70: #{tpu_custom_call.1} parent=43 // pred_check_branch
          %1121 = sbr.rel (%p1119) target = $region72
        $region71: #{tpu_custom_call.1} parent=43 // pred_region
          %1123 = vsyncadd %s1116, 0
          %s1124 = scalar_lea.hbm %s6, %s23
          %s1126 = sshll.u32 %s1118, 4
          %s1127 = int_to_ptr.vmem [resolvable:$true] %s1126
          %s1128 = sshll.u32 %s1124, 4
          %s1129 = int_to_ptr.hbm [resolvable:$true] %s1128
          %1131 = dma.vmem_to_hbm [thread:$0]  %s1127, 16, %s1129, %s1116
        $region72: #{tpu_custom_call.1} parent=43 // pred_fallthru
          _
      $region44: #{tpu_custom_call.1} parent=5 // pred_fallthru
        _
      %p1132 = scmp.le.s32.totalorder 2, %s18
      // Predicated region
      $region73: #{tpu_custom_call.1} parent=5 // pred_check
        %p1133 = pneg %p1132
      $region74: #{tpu_custom_call.1} parent=5 // pred_check_branch
        %1135 = sbr.rel (%p1133) target = $region76
      $region75: #{tpu_custom_call.1} parent=5 // pred_region
        %s1136 = ssub.s32 %s18, 2
        // Predicated region
        $region77: #{tpu_custom_call.1} parent=75 // pred_check
          %p1137 = pneg %p183
        $region78: #{tpu_custom_call.1} parent=75 // pred_check_branch
          %1139 = sbr.rel (%p1137) target = $region80
        $region79: #{tpu_custom_call.1} parent=75 // pred_region
          %s1140 = sand.u32 %s168, 1
          %s1141 = scalar_lea.sflag [#allocation5], %s1140
          %s1142 = sand.u32 %s168, 1
          %s1143 = scalar_lea.vmem [#allocation12], %s1142
          %1145 = dma.done %s1141, 16
        $region80: #{tpu_custom_call.1} parent=75 // pred_fallthru
          _
      $region76: #{tpu_custom_call.1} parent=5 // pred_fallthru
        _
    $region6: #{tpu_custom_call.1} parent=1 // loop_footer
      %s22 = sadd.s32 1, %s18
    $region7: #{tpu_custom_call.1} parent=1 // loop_footer_branch
      %17 = sbr.rel target = $region3
    $region8: #{tpu_custom_call.1} parent=1 // loop_exit
      _
    %1146 = vsyncpa [#allocation4], 1
    %s1147 = scalar_lea.sflag [#allocation4], 1
    %1148 = vsyncpa %s1147, 1
    %1149 = vsyncpa [#allocation7], 1
    %1150 = vsyncpa [#allocation10], 1
    %1151 = vsyncpa [#allocation5], 1
    %s1152 = scalar_lea.sflag [#allocation5], 1
    %1153 = vsyncpa %s1152, 1

</llo_original>
